<compile_context>
chip_gen: v7x
topology: tpu7x:2x2x1
jax: 0.10.0
libtpu: 0.0.40
codegen_flags: <defaults>
</compile_context>

<pallas_src>
import functools

import jax
import jax.numpy as jnp
from jax.experimental import pallas as pl
from jax.experimental.pallas import tpu as pltpu


# Row offsets of each (lane-padded) weight inside the packed bf16 slab.
# Every in-dim is padded to 128 rows (8-aligned) so the kernel only ever does
# full (TB,128) @ (128,128) matmuls -- zero-padded rows/lanes contribute 0.
_W1_R = 0     # Linear(37 -> 31)   rows   0:128 (valid 0:37),    cols 0:31
_W2_R = 128   # Linear(31 -> 28)   rows 128:256 (valid 128:159), cols 0:28
_B2_R = 256   # bias(28)           row  256,                     cols 0:28
_W3_R = 264   # Linear(28 -> 13)   rows 264:392 (valid 264:292), cols 0:13
_W4_R = 392   # Linear(13 -> 10)   rows 392:520 (valid 392:405), cols 0:10
_WS_ROWS = 520
_NUM_CLASSES = 10


def mlp_kernel(x_ref, w0_ref, ws_ref, o_ref):
    # x arrives as f32 straight from the caller; cast in-kernel (free VPU op)
    # so the wrapper never pays a separate HBM pass for the conversion.
    x = x_ref[...].astype(jnp.bfloat16)        # (TB, 784)

    # f0 + f1: Linear(784 -> 37, no bias) + ReLU (lanes >= 37 stay exactly 0)
    h = jnp.dot(x, w0_ref[...], preferred_element_type=jnp.float32)
    h = jnp.maximum(h, 0.0).astype(jnp.bfloat16)

    # f2 + f3: Linear(37 -> 31, no bias) + ReLU
    h = jnp.dot(h, ws_ref[_W1_R:_W1_R + 128, :], preferred_element_type=jnp.float32)
    h = jnp.maximum(h, 0.0).astype(jnp.bfloat16)

    # f4 + f5: Linear(31 -> 28, bias) + ReLU
    h = jnp.dot(h, ws_ref[_W2_R:_W2_R + 128, :], preferred_element_type=jnp.float32)
    h = h + ws_ref[_B2_R:_B2_R + 1, :].astype(jnp.float32)
    h = jnp.maximum(h, 0.0).astype(jnp.bfloat16)

    # f6 + f7: Linear(28 -> 13, no bias) + ReLU
    h = jnp.dot(h, ws_ref[_W3_R:_W3_R + 128, :], preferred_element_type=jnp.float32)
    h = jnp.maximum(h, 0.0).astype(jnp.bfloat16)

    # f8: Linear(13 -> 10, no bias); lanes >= 10 are exactly 0
    logits = jnp.dot(h, ws_ref[_W4_R:_W4_R + 128, :],
                     preferred_element_type=jnp.float32)

    # f9: LogSoftmax over the 10 valid lanes (padded lanes masked out).
    col = jax.lax.broadcasted_iota(jnp.int32, logits.shape, 1)
    valid = col < _NUM_CLASSES
    masked = jnp.where(valid, logits, jnp.float32(-1e30))
    m = jnp.max(masked, axis=-1, keepdims=True)
    e = jnp.exp(masked - m)                    # pad lanes underflow to exactly 0
    lse = jnp.log(jnp.sum(e, axis=-1, keepdims=True))
    # Fold max-shift and normalizer into a single subtract; zero the pad lanes.
    o_ref[...] = jnp.where(valid, logits - (m + lse), 0.0)


def _round_up(n, m):
    return ((n + m - 1) // m) * m


def _choose_tile(batch, block_b):
    """Largest 8-aligned tile <= block_b, but keep >=4 grid steps for large B
    so the 'parallel' batch axis can shard across v7x's two TensorCores."""
    tb = min(block_b, _round_up(batch, 8))
    if batch >= 4 * 256:  # only split when per-step tiles stay >= 256 rows
        tb = min(tb, _round_up(pl.cdiv(batch, 4), 8))
    return max(tb, 8)


@functools.partial(jax.jit, static_argnames=("block_b",))
def linear_relu_16_forward(x_nchw, packed_params, block_b=1024):
    """x_nchw: (B, 1, 28, 28) float32. Returns (B, 10) log-probabilities (f32)."""
    B = x_nchw.shape[0]
    x = x_nchw.reshape(B, 784)  # f32 straight into the kernel (cast happens in-kernel)

    w0p, wsmall = packed_params  # (784,128) bf16, (520,128) bf16

    TB = _choose_tile(B, block_b)
    grid = (pl.cdiv(B, TB),)

    out_padded = pl.pallas_call(
        mlp_kernel,
        out_shape=jax.ShapeDtypeStruct((B, 128), jnp.float32),
        grid=grid,
        in_specs=[
            pl.BlockSpec((TB, 784), lambda i: (i, 0)),        # x: batch-tiled f32
            pl.BlockSpec((784, 128), lambda i: (0, 0)),       # w0: VMEM-resident
            pl.BlockSpec((_WS_ROWS, 128), lambda i: (0, 0)),  # small slab: resident
        ],
        out_specs=pl.BlockSpec((TB, 128), lambda i: (i, 0)),  # lane-dense output
        compiler_params=pltpu.CompilerParams(
            dimension_semantics=("parallel",),
            vmem_limit_bytes=32 * 1024 * 1024,
        ),
    )(x, w0p, wsmall)

    return out_padded[:, :_NUM_CLASSES]


def init_params(key):
    """Deterministic synthetic weights, stored (in, out) = transposed torch layout."""
    keys = jax.random.split(key, 6)

    def uniform(k, shape, fan_in):
        bound = 1.0 / jnp.sqrt(fan_in)
        return jax.random.uniform(k, shape, jnp.float32, -bound, bound)

    w0 = uniform(keys[0], (784, 37), 784)   # f0
    w1 = uniform(keys[1], (37, 31), 37)     # f2
    w2 = uniform(keys[2], (31, 28), 31)     # f4 weight
    b2 = uniform(keys[3], (28,), 31)        # f4 bias
    w3 = uniform(keys[4], (28, 13), 28)     # f6
    w4 = uniform(keys[5], (13, 10), 13)     # f8
    return w0, w1, w2, b2, w3, w4


def pack_params(w0, w1, w2, b2, w3, w4):
    """Pack 6 operands into 2 lane-padded bf16 slabs (one DMA each, VMEM-resident)."""
    w0p = jnp.zeros((784, 128), jnp.float32).at[:, :37].set(w0).astype(jnp.bfloat16)

    slab = jnp.zeros((_WS_ROWS, 128), jnp.float32)
    slab = slab.at[_W1_R:_W1_R + 37, 0:31].set(w1)
    slab = slab.at[_W2_R:_W2_R + 31, 0:28].set(w2)
    slab = slab.at[_B2_R, 0:28].set(b2)
    slab = slab.at[_W3_R:_W3_R + 28, 0:13].set(w3)
    slab = slab.at[_W4_R:_W4_R + 13, 0:10].set(w4)
    return w0p, slab.astype(jnp.bfloat16)


def reference_forward_bf16(x_nchw, raw_params):
    """Pure-JAX reference emulating the kernel's bf16-operand / f32-accum path."""
    w0, w1, w2, b2, w3, w4 = raw_params
    B = x_nchw.shape[0]

    def bf(a):
        return a.astype(jnp.bfloat16).astype(jnp.float32)

    x = bf(x_nchw.reshape(B, 784))
    h = jax.nn.relu(x @ bf(w0))
    h = jax.nn.relu(bf(h) @ bf(w1))
    h = jax.nn.relu(bf(h) @ bf(w2) + bf(b2))
    h = jax.nn.relu(bf(h) @ bf(w3))
    logits = bf(h) @ bf(w4)
    return jax.nn.log_softmax(logits, axis=1)


def reference_forward_f32(x_nchw, raw_params):
    """Pure-f32 reference of the original module math (loose sanity bound)."""
    w0, w1, w2, b2, w3, w4 = raw_params
    B = x_nchw.shape[0]
    x = x_nchw.reshape(B, 784)
    h = jax.nn.relu(x @ w0)
    h = jax.nn.relu(h @ w1)
    h = jax.nn.relu(h @ w2 + b2)
    h = jax.nn.relu(h @ w3)
    logits = h @ w4
    return jax.nn.log_softmax(logits, axis=1)


if __name__ == "__main__":
    key = jax.random.PRNGKey(0)
    pkey, xkey = jax.random.split(key)

    raw_params = init_params(pkey)
    packed = pack_params(*raw_params)

    # MNIST-shaped input, small batch.
    x = jax.random.normal(xkey, (8, 1, 28, 28), jnp.float32)

    out = linear_relu_16_forward(x, packed)
    out = jax.block_until_ready(out)

    assert out.shape == (8, 10)

    # Sanity 1: log-softmax rows (log-)sum to ~0.
    row_logsumexp = jax.scipy.special.logsumexp(out, axis=1)
    assert jnp.allclose(row_logsumexp, 0.0, atol=1e-4)

    # Sanity 2: matches a pure-JAX reference of the same bf16-operand math.
    ref_bf16 = reference_forward_bf16(x, raw_params)
    assert jnp.allclose(out, ref_bf16, atol=2e-3, rtol=2e-3)

    # Sanity 3: close to the full-f32 module semantics (loose bound for bf16 path).
    ref_f32 = reference_forward_f32(x, raw_params)
    assert jnp.allclose(out, ref_f32, atol=5e-2, rtol=5e-2)

    print("KERNEL_OK")
</pallas_src>

<mosaic_0001>
module attributes {stable_mosaic.version = 11 : i64} {
  func.func @mlp_kernel(%arg0: i32, %arg1: memref<8x784xf32, #tpu.memory_space<vmem>>, %arg2: memref<784x128xbf16, #tpu.memory_space<vmem>>, %arg3: memref<520x128xbf16, #tpu.memory_space<vmem>>, %arg4: memref<8x128xf32, #tpu.memory_space<vmem>>) attributes {dimension_semantics = [#tpu.dimension_semantics<parallel>], iteration_bounds = array<i64: 1>, scalar_prefetch = 0 : i64, scratch_operands = 0 : i64, tpu.core_type = #tpu.core_type<tc>, window_params = [{transform_indices = @transform_0, window_bounds = array<i64: 8, 784>}, {pipeline_mode = #tpu.pipeline_mode<synchronous>, transform_indices = @transform_1, window_bounds = array<i64: 784, 128>}, {pipeline_mode = #tpu.pipeline_mode<synchronous>, transform_indices = @transform_2, window_bounds = array<i64: 520, 128>}, {transform_indices = @transform_3, window_bounds = array<i64: 8, 128>}]} {
    %c0 = arith.constant 0 : index
    %c0_0 = arith.constant 0 : index
    %0 = vector.load %arg1[%c0, %c0_0] : memref<8x784xf32, #tpu.memory_space<vmem>>, vector<8x784xf32>
    %1 = arith.truncf %0 : vector<8x784xf32> to vector<8x784xbf16>
    %c0_1 = arith.constant 0 : index
    %c0_2 = arith.constant 0 : index
    %2 = vector.load %arg2[%c0_1, %c0_2] : memref<784x128xbf16, #tpu.memory_space<vmem>>, vector<784x128xbf16>
    %cst = arith.constant dense<0.000000e+00> : vector<8x128xf32>
    %3 = tpu.matmul %1, %2, %cst {dimension_numbers = #tpu.dot_dimension_numbers<[1], [0], [0], [1], [0, 0, 1, 1], [], []>} : vector<8x784xbf16>, vector<784x128xbf16>, vector<8x128xf32> -> vector<8x128xf32>
    %cst_3 = arith.constant 0.000000e+00 : f32
    %4 = vector.broadcast %cst_3 : f32 to vector<8x128xf32>
    %5 = arith.maximumf %3, %4 : vector<8x128xf32>
    %6 = arith.truncf %5 : vector<8x128xf32> to vector<8x128xbf16>
    %c0_4 = arith.constant 0 : index
    %c0_5 = arith.constant 0 : index
    %7 = vector.load %arg3[%c0_4, %c0_5] : memref<520x128xbf16, #tpu.memory_space<vmem>>, vector<128x128xbf16>
    %cst_6 = arith.constant dense<0.000000e+00> : vector<8x128xf32>
    %8 = tpu.matmul %6, %7, %cst_6 {dimension_numbers = #tpu.dot_dimension_numbers<[1], [0], [0], [1], [0, 0, 1, 1], [], []>} : vector<8x128xbf16>, vector<128x128xbf16>, vector<8x128xf32> -> vector<8x128xf32>
    %cst_7 = arith.constant 0.000000e+00 : f32
    %9 = vector.broadcast %cst_7 : f32 to vector<8x128xf32>
    %10 = arith.maximumf %8, %9 : vector<8x128xf32>
    %11 = arith.truncf %10 : vector<8x128xf32> to vector<8x128xbf16>
    %c128 = arith.constant 128 : index
    %c0_8 = arith.constant 0 : index
    %12 = vector.load %arg3[%c128, %c0_8] : memref<520x128xbf16, #tpu.memory_space<vmem>>, vector<128x128xbf16>
    %cst_9 = arith.constant dense<0.000000e+00> : vector<8x128xf32>
    %13 = tpu.matmul %11, %12, %cst_9 {dimension_numbers = #tpu.dot_dimension_numbers<[1], [0], [0], [1], [0, 0, 1, 1], [], []>} : vector<8x128xbf16>, vector<128x128xbf16>, vector<8x128xf32> -> vector<8x128xf32>
    %c256 = arith.constant 256 : index
    %c0_10 = arith.constant 0 : index
    %14 = vector.load %arg3[%c256, %c0_10] : memref<520x128xbf16, #tpu.memory_space<vmem>>, vector<1x128xbf16>
    %15 = arith.extf %14 : vector<1x128xbf16> to vector<1x128xf32>
    %16 = vector.broadcast %15 : vector<1x128xf32> to vector<8x128xf32>
    %17 = arith.addf %13, %16 : vector<8x128xf32>
    %cst_11 = arith.constant 0.000000e+00 : f32
    %18 = vector.broadcast %cst_11 : f32 to vector<8x128xf32>
    %19 = arith.maximumf %17, %18 : vector<8x128xf32>
    %20 = arith.truncf %19 : vector<8x128xf32> to vector<8x128xbf16>
    %c264 = arith.constant 264 : index
    %c0_12 = arith.constant 0 : index
    %21 = vector.load %arg3[%c264, %c0_12] : memref<520x128xbf16, #tpu.memory_space<vmem>>, vector<128x128xbf16>
    %cst_13 = arith.constant dense<0.000000e+00> : vector<8x128xf32>
    %22 = tpu.matmul %20, %21, %cst_13 {dimension_numbers = #tpu.dot_dimension_numbers<[1], [0], [0], [1], [0, 0, 1, 1], [], []>} : vector<8x128xbf16>, vector<128x128xbf16>, vector<8x128xf32> -> vector<8x128xf32>
    %cst_14 = arith.constant 0.000000e+00 : f32
    %23 = vector.broadcast %cst_14 : f32 to vector<8x128xf32>
    %24 = arith.maximumf %22, %23 : vector<8x128xf32>
    %25 = arith.truncf %24 : vector<8x128xf32> to vector<8x128xbf16>
    %c392 = arith.constant 392 : index
    %c0_15 = arith.constant 0 : index
    %26 = vector.load %arg3[%c392, %c0_15] : memref<520x128xbf16, #tpu.memory_space<vmem>>, vector<128x128xbf16>
    %cst_16 = arith.constant dense<0.000000e+00> : vector<8x128xf32>
    %27 = tpu.matmul %25, %26, %cst_16 {dimension_numbers = #tpu.dot_dimension_numbers<[1], [0], [0], [1], [0, 0, 1, 1], [], []>} : vector<8x128xbf16>, vector<128x128xbf16>, vector<8x128xf32> -> vector<8x128xf32>
    %28 = tpu.iota {dimensions = array<i32: 1>} : vector<8x128xi32>
    %c10_i32 = arith.constant 10 : i32
    %29 = vector.broadcast %c10_i32 : i32 to vector<8x128xi32>
    %30 = arith.cmpi slt, %28, %29 : vector<8x128xi32>
    %cst_17 = arith.constant -1.000000e+30 : f32
    %31 = vector.broadcast %cst_17 : f32 to vector<8x128xf32>
    %32 = arith.select %30, %27, %31 : vector<8x128xi1>, vector<8x128xf32>
    %cst_18 = arith.constant dense<0xFF800000> : vector<8xf32>
    %33 = vector.multi_reduction <maximumf>, %32, %cst_18 [1] : vector<8x128xf32> to vector<8xf32>
    %34 = vector.shape_cast %33 : vector<8xf32> to vector<8x1xf32>
    %35 = vector.broadcast %34 : vector<8x1xf32> to vector<8x128xf32>
    %36 = arith.subf %32, %35 : vector<8x128xf32>
    %37 = math.exp %36 : vector<8x128xf32>
    %cst_19 = arith.constant dense<0.000000e+00> : vector<8xf32>
    %38 = vector.multi_reduction <add>, %37, %cst_19 [1] : vector<8x128xf32> to vector<8xf32>
    %39 = vector.shape_cast %38 : vector<8xf32> to vector<8x1xf32>
    %40 = math.log %39 : vector<8x1xf32>
    %41 = arith.addf %34, %40 : vector<8x1xf32>
    %42 = vector.broadcast %41 : vector<8x1xf32> to vector<8x128xf32>
    %43 = arith.subf %27, %42 : vector<8x128xf32>
    %cst_20 = arith.constant 0.000000e+00 : f32
    %44 = vector.broadcast %cst_20 : f32 to vector<8x128xf32>
    %45 = arith.select %30, %43, %44 : vector<8x128xi1>, vector<8x128xf32>
    %c0_21 = arith.constant 0 : index
    %c0_22 = arith.constant 0 : index
    %46 = vector.load %arg4[%c0_21, %c0_22] : memref<8x128xf32, #tpu.memory_space<vmem>>, vector<8x128xf32>
    tpu.vector_store %arg4[%c0_21, %c0_22], %45 {strides = array<i32>} : memref<8x128xf32, #tpu.memory_space<vmem>>, vector<8x128xf32>,
    return
  }
  func.func @transform_0(%arg0: i32) -> (i32, i32) {
    %c0_i32 = arith.constant 0 : i32
    %c0_i32_0 = arith.constant 0 : i32
    return %arg0, %c0_i32 : i32, i32
  }
  func.func @transform_1(%arg0: i32) -> (i32, i32) {
    %c0_i32 = arith.constant 0 : i32
    %c0_i32_0 = arith.constant 0 : i32
    %c0_i32_1 = arith.constant 0 : i32
    return %c0_i32, %c0_i32_0 : i32, i32
  }
  func.func @transform_2(%arg0: i32) -> (i32, i32) {
    %c0_i32 = arith.constant 0 : i32
    %c0_i32_0 = arith.constant 0 : i32
    %c0_i32_1 = arith.constant 0 : i32
    return %c0_i32, %c0_i32_0 : i32, i32
  }
  func.func @transform_3(%arg0: i32) -> (i32, i32) {
    %c0_i32 = arith.constant 0 : i32
    %c0_i32_0 = arith.constant 0 : i32
    return %arg0, %c0_i32 : i32, i32
  }
}

</mosaic_0001>

<llo_original>
// kernel: linear_relu_16_forward.1
$region0: #{linear_relu_16_forward.1}
  #allocation0 [shape = 'u32[]', space=smem, size = 0x4, offset = 0x4, fixed_abs, tag = 'smem constant byte address 0x4 - core index']
  #allocation1 [shape = 'u32[144,128]{1,0:T(1,128)}', space=vmem, size = 0x12000, scoped, tag = 'internal scratch']
  %s0 = inlined_call_operand.vmem [shape: f32[8,784], index: 0, kind: input, shape index: {}]
  %s1 = inlined_call_operand.vmem [shape: bf16[784,128], index: 1, kind: input, shape index: {}]
  %s2 = inlined_call_operand.vmem [shape: bf16[520,128], index: 2, kind: input, shape index: {}]
  %s3 = inlined_call_operand.hbm [shape: f32[8,128], index: 3, kind: output, shape index: {}]
  %s4 = sld [smem:[#allocation0]]
  $region22: #{linear_relu_16_forward.1} parent=0
    _
  %s6 = ssub.s32 1, %s4
  %s7 = scalar_select 0, %s6, %s4
  $region1: #{linear_relu_16_forward.1} parent=0
    #allocation2 [shape = 'u8[4096]{0}', space=vmem, size = 0x1000, scoped, tag = 'output window, operand 0, single buffered']
    #allocation3 [shape = 's32[1]{0}', space=sflag, size = 0x4, scoped, tag = 'scoped memory for linear_relu_16_forward.1']
    %8 = vsyncpa [#allocation3], 0
    // Predicated region
    $region2: #{linear_relu_16_forward.1} parent=1 // pred_check
      _
    $region3: #{linear_relu_16_forward.1} parent=1 // pred_check_branch
      %10 = sbr.rel (0) target = $region5
    $region4: #{linear_relu_16_forward.1} parent=1 // pred_region
      _
    $region5: #{linear_relu_16_forward.1} parent=1 // pred_fallthru
      _
    // Predicated region
    $region6: #{linear_relu_16_forward.1} parent=1 // pred_check
      _
    $region7: #{linear_relu_16_forward.1} parent=1 // pred_check_branch
      %12 = sbr.rel (0) target = $region9
    $region8: #{linear_relu_16_forward.1} parent=1 // pred_region
      _
    $region9: #{linear_relu_16_forward.1} parent=1 // pred_fallthru
      _
    // Predicated region
    $region10: #{linear_relu_16_forward.1} parent=1 // pred_check
      _
    $region11: #{linear_relu_16_forward.1} parent=1 // pred_check_branch
      %14 = sbr.rel (0) target = $region13
    $region12: #{linear_relu_16_forward.1} parent=1 // pred_region
      _
    $region13: #{linear_relu_16_forward.1} parent=1 // pred_fallthru
      _
    %v16 = vld [vmem:[%s0] sm:$0xff]
    %v17 = vld [vmem:[%s0 + $0x8] sm:$0xff]
    %v18 = vld [vmem:[%s0 + $0x10] sm:$0xff]
    %v19 = vld [vmem:[%s0 + $0x18] sm:$0xff]
    %v20 = vld [vmem:[%s0 + $0x20] sm:$0xff]
    %v21 = vld [vmem:[%s0 + $0x28] sm:$0xff]
    %v22 = vld [vmem:[%s0 + $0x30] sm:$0xff]
    %v23 = vpack.c.bf16 %v16, %v16
    %v24 = vpack.c.bf16 %v17, %v17
    %v25 = vpack.c.bf16 %v18, %v18
    %v26 = vpack.c.bf16 %v19, %v19
    %v27 = vpack.c.bf16 %v20, %v20
    %v28 = vpack.c.bf16 %v21, %v21
    %v29 = vpack.c.bf16 %v22, %v22
    %v30 = vld [vmem:[%s1] sm:$0xf]
    %v31 = vld [vmem:[%s1 + $0x4] sm:$0xf]
    %v32 = vld [vmem:[%s1 + $0x8] sm:$0xf]
    %v33 = vld [vmem:[%s1 + $0xc] sm:$0xf]
    %v34 = vld [vmem:[%s1 + $0x10] sm:$0xf]
    %v35 = vld [vmem:[%s1 + $0x14] sm:$0xf]
    %v36 = vld [vmem:[%s1 + $0x18] sm:$0xf]
    %v37 = vld [vmem:[%s1 + $0x1c] sm:$0xf]
    %v38 = vld [vmem:[%s1 + $0x20] sm:$0xf]
    %v39 = vld [vmem:[%s1 + $0x24] sm:$0xf]
    %v40 = vld [vmem:[%s1 + $0x28] sm:$0xf]
    %v41 = vld [vmem:[%s1 + $0x2c] sm:$0xf]
    %v42 = vld [vmem:[%s1 + $0x30] sm:$0xf]
    %v43 = vld [vmem:[%s1 + $0x34] sm:$0xf]
    %v44 = vld [vmem:[%s1 + $0x38] sm:$0xf]
    %v45 = vld [vmem:[%s1 + $0x3c] sm:$0xf]
    %v46 = vld [vmem:[%s1 + $0x40] sm:$0xf]
    %v47 = vld [vmem:[%s1 + $0x44] sm:$0xf]
    %v48 = vld [vmem:[%s1 + $0x48] sm:$0xf]
    %v49 = vld [vmem:[%s1 + $0x4c] sm:$0xf]
    %v50 = vld [vmem:[%s1 + $0x50] sm:$0xf]
    %v51 = vld [vmem:[%s1 + $0x54] sm:$0xf]
    %v52 = vld [vmem:[%s1 + $0x58] sm:$0xf]
    %v53 = vld [vmem:[%s1 + $0x5c] sm:$0xf]
    %v54 = vld [vmem:[%s1 + $0x60] sm:$0xf]
    %v55 = vld [vmem:[%s1 + $0x64] sm:$0xf]
    %v56 = vld [vmem:[%s1 + $0x68] sm:$0xf]
    %v57 = vld [vmem:[%s1 + $0x6c] sm:$0xf]
    %v58 = vld [vmem:[%s1 + $0x70] sm:$0xf]
    %v59 = vld [vmem:[%s1 + $0x74] sm:$0xf]
    %v60 = vld [vmem:[%s1 + $0x78] sm:$0xf]
    %v61 = vld [vmem:[%s1 + $0x7c] sm:$0xf]
    %v62 = vld [vmem:[%s1 + $0x80] sm:$0xf]
    %v63 = vld [vmem:[%s1 + $0x84] sm:$0xf]
    %v64 = vld [vmem:[%s1 + $0x88] sm:$0xf]
    %v65 = vld [vmem:[%s1 + $0x8c] sm:$0xf]
    %v66 = vld [vmem:[%s1 + $0x90] sm:$0xf]
    %v67 = vld [vmem:[%s1 + $0x94] sm:$0xf]
    %v68 = vld [vmem:[%s1 + $0x98] sm:$0xf]
    %v69 = vld [vmem:[%s1 + $0x9c] sm:$0xf]
    %v70 = vld [vmem:[%s1 + $0xa0] sm:$0xf]
    %v71 = vld [vmem:[%s1 + $0xa4] sm:$0xf]
    %v72 = vld [vmem:[%s1 + $0xa8] sm:$0xf]
    %v73 = vld [vmem:[%s1 + $0xac] sm:$0xf]
    %v74 = vld [vmem:[%s1 + $0xb0] sm:$0xf]
    %v75 = vld [vmem:[%s1 + $0xb4] sm:$0xf]
    %v76 = vld [vmem:[%s1 + $0xb8] sm:$0xf]
    %v77 = vld [vmem:[%s1 + $0xbc] sm:$0xf]
    %v78 = vld [vmem:[%s1 + $0xc0] sm:$0xf]
    %v79 = vld [vmem:[%s1 + $0xc4] sm:$0xf]
    %v80 = vld [vmem:[%s1 + $0xc8] sm:$0xf]
    %v81 = vld [vmem:[%s1 + $0xcc] sm:$0xf]
    %v82 = vld [vmem:[%s1 + $0xd0] sm:$0xf]
    %v83 = vld [vmem:[%s1 + $0xd4] sm:$0xf]
    %v84 = vld [vmem:[%s1 + $0xd8] sm:$0xf]
    %v85 = vld [vmem:[%s1 + $0xdc] sm:$0xf]
    %v86 = vld [vmem:[%s1 + $0xe0] sm:$0xf]
    %v87 = vld [vmem:[%s1 + $0xe4] sm:$0xf]
    %v88 = vld [vmem:[%s1 + $0xe8] sm:$0xf]
    %v89 = vld [vmem:[%s1 + $0xec] sm:$0xf]
    %v90 = vld [vmem:[%s1 + $0xf0] sm:$0xf]
    %v91 = vld [vmem:[%s1 + $0xf4] sm:$0xf]
    %v92 = vld [vmem:[%s1 + $0xf8] sm:$0xf]
    %v93 = vld [vmem:[%s1 + $0xfc] sm:$0xf]
    %v94 = vld [vmem:[%s1 + $0x100] sm:$0xf]
    %v95 = vld [vmem:[%s1 + $0x104] sm:$0xf]
    %v96 = vld [vmem:[%s1 + $0x108] sm:$0xf]
    %v97 = vld [vmem:[%s1 + $0x10c] sm:$0xf]
    %v98 = vld [vmem:[%s1 + $0x110] sm:$0xf]
    %v99 = vld [vmem:[%s1 + $0x114] sm:$0xf]
    %v100 = vld [vmem:[%s1 + $0x118] sm:$0xf]
    %v101 = vld [vmem:[%s1 + $0x11c] sm:$0xf]
    %v102 = vld [vmem:[%s1 + $0x120] sm:$0xf]
    %v103 = vld [vmem:[%s1 + $0x124] sm:$0xf]
    %v104 = vld [vmem:[%s1 + $0x128] sm:$0xf]
    %v105 = vld [vmem:[%s1 + $0x12c] sm:$0xf]
    %v106 = vld [vmem:[%s1 + $0x130] sm:$0xf]
    %v107 = vld [vmem:[%s1 + $0x134] sm:$0xf]
    %v108 = vld [vmem:[%s1 + $0x138] sm:$0xf]
    %v109 = vld [vmem:[%s1 + $0x13c] sm:$0xf]
    %v110 = vld [vmem:[%s1 + $0x140] sm:$0xf]
    %v111 = vld [vmem:[%s1 + $0x144] sm:$0xf]
    %v112 = vld [vmem:[%s1 + $0x148] sm:$0xf]
    %v113 = vld [vmem:[%s1 + $0x14c] sm:$0xf]
    %v114 = vld [vmem:[%s1 + $0x150] sm:$0xf]
    %v115 = vld [vmem:[%s1 + $0x154] sm:$0xf]
    %v116 = vld [vmem:[%s1 + $0x158] sm:$0xf]
    %v117 = vld [vmem:[%s1 + $0x15c] sm:$0xf]
    %v118 = vld [vmem:[%s1 + $0x160] sm:$0xf]
    %v119 = vld [vmem:[%s1 + $0x164] sm:$0xf]
    %v120 = vld [vmem:[%s1 + $0x168] sm:$0xf]
    %v121 = vld [vmem:[%s1 + $0x16c] sm:$0xf]
    %v122 = vld [vmem:[%s1 + $0x170] sm:$0xf]
    %v123 = vld [vmem:[%s1 + $0x174] sm:$0xf]
    %v124 = vld [vmem:[%s1 + $0x178] sm:$0xf]
    %v125 = vld [vmem:[%s1 + $0x17c] sm:$0xf]
    %v126 = vld [vmem:[%s1 + $0x180] sm:$0xf]
    %v127 = vld [vmem:[%s1 + $0x184] sm:$0xf]
    %v226 = vunpack.c.l.b16 %v30
    %v227 = vunpack.c.l.b16 %v31
    %v228 = vunpack.c.l.b16 %v32
    %v229 = vunpack.c.l.b16 %v33
    %v230 = vunpack.c.l.b16 %v34
    %v231 = vunpack.c.l.b16 %v35
    %v232 = vunpack.c.l.b16 %v36
    %v233 = vunpack.c.l.b16 %v37
    %v234 = vunpack.c.l.b16 %v38
    %v235 = vunpack.c.l.b16 %v39
    %v236 = vunpack.c.l.b16 %v40
    %v237 = vunpack.c.l.b16 %v41
    %v238 = vunpack.c.l.b16 %v42
    %v239 = vunpack.c.l.b16 %v43
    %v240 = vunpack.c.l.b16 %v44
    %v241 = vunpack.c.l.b16 %v45
    %v242 = vunpack.c.l.b16 %v46
    %v243 = vunpack.c.l.b16 %v47
    %v244 = vunpack.c.l.b16 %v48
    %v245 = vunpack.c.l.b16 %v49
    %v246 = vunpack.c.l.b16 %v50
    %v247 = vunpack.c.l.b16 %v51
    %v248 = vunpack.c.l.b16 %v52
    %v249 = vunpack.c.l.b16 %v53
    %v250 = vunpack.c.l.b16 %v54
    %v251 = vunpack.c.l.b16 %v55
    %v252 = vunpack.c.l.b16 %v56
    %v253 = vunpack.c.l.b16 %v57
    %v254 = vunpack.c.l.b16 %v58
    %v255 = vunpack.c.l.b16 %v59
    %v256 = vunpack.c.l.b16 %v60
    %v257 = vunpack.c.l.b16 %v61
    %v258 = vunpack.c.l.b16 %v62
    %v259 = vunpack.c.l.b16 %v63
    %v260 = vunpack.c.l.b16 %v64
    %v261 = vunpack.c.l.b16 %v65
    %v262 = vunpack.c.l.b16 %v66
    %v263 = vunpack.c.l.b16 %v67
    %v264 = vunpack.c.l.b16 %v68
    %v265 = vunpack.c.l.b16 %v69
    %v266 = vunpack.c.l.b16 %v70
    %v267 = vunpack.c.l.b16 %v71
    %v268 = vunpack.c.l.b16 %v72
    %v269 = vunpack.c.l.b16 %v73
    %v270 = vunpack.c.l.b16 %v74
    %v271 = vunpack.c.l.b16 %v75
    %v272 = vunpack.c.l.b16 %v76
    %v273 = vunpack.c.l.b16 %v77
    %v274 = vunpack.c.l.b16 %v78
    %v275 = vunpack.c.l.b16 %v79
    %v276 = vunpack.c.l.b16 %v80
    %v277 = vunpack.c.l.b16 %v81
    %v278 = vunpack.c.l.b16 %v82
    %v279 = vunpack.c.l.b16 %v83
    %v280 = vunpack.c.l.b16 %v84
    %v281 = vunpack.c.l.b16 %v85
    %v282 = vunpack.c.l.b16 %v86
    %v283 = vunpack.c.l.b16 %v87
    %v284 = vunpack.c.l.b16 %v88
    %v285 = vunpack.c.l.b16 %v89
    %v286 = vunpack.c.l.b16 %v90
    %v287 = vunpack.c.l.b16 %v91
    %v288 = vunpack.c.l.b16 %v92
    %v289 = vunpack.c.l.b16 %v93
    %v290 = vunpack.c.l.b16 %v94
    %v291 = vunpack.c.l.b16 %v95
    %v292 = vunpack.c.l.b16 %v96
    %v293 = vunpack.c.l.b16 %v97
    %v294 = vunpack.c.l.b16 %v98
    %v295 = vunpack.c.l.b16 %v99
    %v296 = vunpack.c.l.b16 %v100
    %v297 = vunpack.c.l.b16 %v101
    %v298 = vunpack.c.l.b16 %v102
    %v299 = vunpack.c.l.b16 %v103
    %v300 = vunpack.c.l.b16 %v104
    %v301 = vunpack.c.l.b16 %v105
    %v302 = vunpack.c.l.b16 %v106
    %v303 = vunpack.c.l.b16 %v107
    %v304 = vunpack.c.l.b16 %v108
    %v305 = vunpack.c.l.b16 %v109
    %v306 = vunpack.c.l.b16 %v110
    %v307 = vunpack.c.l.b16 %v111
    %v308 = vunpack.c.l.b16 %v112
    %v309 = vunpack.c.l.b16 %v113
    %v310 = vunpack.c.l.b16 %v114
    %v311 = vunpack.c.l.b16 %v115
    %v312 = vunpack.c.l.b16 %v116
    %v313 = vunpack.c.l.b16 %v117
    %v314 = vunpack.c.l.b16 %v118
    %v315 = vunpack.c.l.b16 %v119
    %v316 = vunpack.c.l.b16 %v120
    %v317 = vunpack.c.l.b16 %v121
    %v318 = vunpack.c.l.b16 %v122
    %v319 = vunpack.c.l.b16 %v123
    %v320 = vunpack.c.l.b16 %v124
    %v321 = vunpack.c.l.b16 %v125
    %v322 = vunpack.c.l.b16 %v126
    %v323 = vunpack.c.l.b16 %v127
    %v324 = vpack.c.b16 %v227, %v226
    %v325 = vpack.c.b16 %v229, %v228
    %v326 = vpack.c.b16 %v231, %v230
    %v327 = vpack.c.b16 %v233, %v232
    %v328 = vpack.c.b16 %v235, %v234
    %v329 = vpack.c.b16 %v237, %v236
    %v330 = vpack.c.b16 %v239, %v238
    %v331 = vpack.c.b16 %v241, %v240
    %v332 = vpack.c.b16 %v243, %v242
    %v333 = vpack.c.b16 %v245, %v244
    %v334 = vpack.c.b16 %v247, %v246
    %v335 = vpack.c.b16 %v249, %v248
    %v336 = vpack.c.b16 %v251, %v250
    %v337 = vpack.c.b16 %v253, %v252
    %v338 = vpack.c.b16 %v255, %v254
    %v339 = vpack.c.b16 %v257, %v256
    %v340 = vpack.c.b16 %v259, %v258
    %v341 = vpack.c.b16 %v261, %v260
    %v342 = vpack.c.b16 %v263, %v262
    %v343 = vpack.c.b16 %v265, %v264
    %v344 = vpack.c.b16 %v267, %v266
    %v345 = vpack.c.b16 %v269, %v268
    %v346 = vpack.c.b16 %v271, %v270
    %v347 = vpack.c.b16 %v273, %v272
    %v348 = vpack.c.b16 %v275, %v274
    %v349 = vpack.c.b16 %v277, %v276
    %v350 = vpack.c.b16 %v279, %v278
    %v351 = vpack.c.b16 %v281, %v280
    %v352 = vpack.c.b16 %v283, %v282
    %v353 = vpack.c.b16 %v285, %v284
    %v354 = vpack.c.b16 %v287, %v286
    %v355 = vpack.c.b16 %v289, %v288
    %v356 = vpack.c.b16 %v291, %v290
    %v357 = vpack.c.b16 %v293, %v292
    %v358 = vpack.c.b16 %v295, %v294
    %v359 = vpack.c.b16 %v297, %v296
    %v360 = vpack.c.b16 %v299, %v298
    %v361 = vpack.c.b16 %v301, %v300
    %v362 = vpack.c.b16 %v303, %v302
    %v363 = vpack.c.b16 %v305, %v304
    %v364 = vpack.c.b16 %v307, %v306
    %v365 = vpack.c.b16 %v309, %v308
    %v366 = vpack.c.b16 %v311, %v310
    %v367 = vpack.c.b16 %v313, %v312
    %v368 = vpack.c.b16 %v315, %v314
    %v369 = vpack.c.b16 %v317, %v316
    %v370 = vpack.c.b16 %v319, %v318
    %v371 = vpack.c.b16 %v321, %v320
    %v372 = vpack.c.b16 %v323, %v322
    %vm422 = vcmask 130048
    %v424 = vsel %vm422, %v29, 0
    %426 = vmatprep.subr.bf16.mxu0 0
    %427 = vmatpush1.bf16.msra.mxu0 %v324
    %428 = vmatprep.subr.bf16.mxu0 0
    %429 = vmatpush1.bf16.msra.mxu0 %v325
    %430 = vmatprep.subr.bf16.mxu0 0
    %431 = vmatpush1.bf16.msra.mxu0 %v326
    %432 = vmatprep.subr.bf16.mxu0 0
    %433 = vmatpush1.bf16.msra.mxu0 %v327
    %434 = vmatprep.subr.bf16.mxu0 0
    %435 = vmatpush1.bf16.msra.mxu0 %v328
    %436 = vmatprep.subr.bf16.mxu0 0
    %437 = vmatpush1.bf16.msra.mxu0 %v329
    %438 = vmatprep.subr.bf16.mxu0 0
    %439 = vmatpush1.bf16.msra.mxu0 %v330
    %440 = vmatprep.subr.bf16.mxu0 0
    %441 = vmatpush1.bf16.msra.mxu0 %v331
    %442 = vmatprep.subr.bf16.mxu0 0
    %443 = vmatpush1.bf16.msra.mxu0 %v332
    %444 = vmatprep.subr.bf16.mxu0 0
    %445 = vmatpush1.bf16.msra.mxu0 %v333
    %446 = vmatprep.subr.bf16.mxu0 0
    %447 = vmatpush1.bf16.msra.mxu0 %v334
    %448 = vmatprep.subr.bf16.mxu0 0
    %449 = vmatpush1.bf16.msra.mxu0 %v335
    %450 = vmatprep.subr.bf16.mxu0 0
    %451 = vmatpush1.bf16.msra.mxu0 %v336
    %452 = vmatprep.subr.bf16.mxu0 0
    %453 = vmatpush1.bf16.msra.mxu0 %v337
    %454 = vmatprep.subr.bf16.mxu0 0
    %455 = vmatpush1.bf16.msra.mxu0 %v338
    %456 = vmatprep.subr.bf16.mxu0 0
    %457 = vmatpush1.bf16.msra.mxu0 %v339
    %458 = vmatprep.mubr.bf16.mxu0 %v24
    %459 = vmatmul.mubr.bf16.gmra.mrb[0].mxu0 %v23
    %v460 = vpop.f32.mrb[0].mxu0
    %v461 = vadd.f32 0.0, %v460
    %v462 = vpop.f32.mrb[0].mxu0
    %v463 = vpop.f32.mrb[0].mxu0
    %v464 = vpop.f32.mrb[0].mxu0
    %465 = vdwg.mxu0
    %466 = vmatprep.subr.bf16.mxu0 0
    %467 = vmatpush1.bf16.msra.mxu0 %v340
    %468 = vmatprep.subr.bf16.mxu0 0
    %469 = vmatpush1.bf16.msra.mxu0 %v341
    %470 = vmatprep.subr.bf16.mxu0 0
    %471 = vmatpush1.bf16.msra.mxu0 %v342
    %472 = vmatprep.subr.bf16.mxu0 0
    %473 = vmatpush1.bf16.msra.mxu0 %v343
    %474 = vmatprep.subr.bf16.mxu0 0
    %475 = vmatpush1.bf16.msra.mxu0 %v344
    %476 = vmatprep.subr.bf16.mxu0 0
    %477 = vmatpush1.bf16.msra.mxu0 %v345
    %478 = vmatprep.subr.bf16.mxu0 0
    %479 = vmatpush1.bf16.msra.mxu0 %v346
    %480 = vmatprep.subr.bf16.mxu0 0
    %481 = vmatpush1.bf16.msra.mxu0 %v347
    %482 = vmatprep.subr.bf16.mxu0 0
    %483 = vmatpush1.bf16.msra.mxu0 %v348
    %484 = vmatprep.subr.bf16.mxu0 0
    %485 = vmatpush1.bf16.msra.mxu0 %v349
    %486 = vmatprep.subr.bf16.mxu0 0
    %487 = vmatpush1.bf16.msra.mxu0 %v350
    %488 = vmatprep.subr.bf16.mxu0 0
    %489 = vmatpush1.bf16.msra.mxu0 %v351
    %490 = vmatprep.subr.bf16.mxu0 0
    %491 = vmatpush1.bf16.msra.mxu0 %v352
    %492 = vmatprep.subr.bf16.mxu0 0
    %493 = vmatpush1.bf16.msra.mxu0 %v353
    %494 = vmatprep.subr.bf16.mxu0 0
    %495 = vmatpush1.bf16.msra.mxu0 %v354
    %496 = vmatprep.subr.bf16.mxu0 0
    %497 = vmatpush1.bf16.msra.mxu0 %v355
    %498 = vmatprep.mubr.bf16.mxu0 %v26
    %499 = vmatmul.mubr.bf16.gmra.mrb[0].mxu0 %v25
    %v500 = vpop.f32.mrb[0].mxu0
    %v501 = vadd.f32 %v461, %v500
    %v502 = vpop.f32.mrb[0].mxu0
    %v503 = vpop.f32.mrb[0].mxu0
    %v504 = vpop.f32.mrb[0].mxu0
    %505 = vdwg.mxu0
    %506 = vmatprep.subr.bf16.mxu0 0
    %507 = vmatpush1.bf16.msra.mxu0 %v356
    %508 = vmatprep.subr.bf16.mxu0 0
    %509 = vmatpush1.bf16.msra.mxu0 %v357
    %510 = vmatprep.subr.bf16.mxu0 0
    %511 = vmatpush1.bf16.msra.mxu0 %v358
    %512 = vmatprep.subr.bf16.mxu0 0
    %513 = vmatpush1.bf16.msra.mxu0 %v359
    %514 = vmatprep.subr.bf16.mxu0 0
    %515 = vmatpush1.bf16.msra.mxu0 %v360
    %516 = vmatprep.subr.bf16.mxu0 0
    %517 = vmatpush1.bf16.msra.mxu0 %v361
    %518 = vmatprep.subr.bf16.mxu0 0
    %519 = vmatpush1.bf16.msra.mxu0 %v362
    %520 = vmatprep.subr.bf16.mxu0 0
    %521 = vmatpush1.bf16.msra.mxu0 %v363
    %522 = vmatprep.subr.bf16.mxu0 0
    %523 = vmatpush1.bf16.msra.mxu0 %v364
    %524 = vmatprep.subr.bf16.mxu0 0
    %525 = vmatpush1.bf16.msra.mxu0 %v365
    %526 = vmatprep.subr.bf16.mxu0 0
    %527 = vmatpush1.bf16.msra.mxu0 %v366
    %528 = vmatprep.subr.bf16.mxu0 0
    %529 = vmatpush1.bf16.msra.mxu0 %v367
    %530 = vmatprep.subr.bf16.mxu0 0
    %531 = vmatpush1.bf16.msra.mxu0 %v368
    %532 = vmatprep.subr.bf16.mxu0 0
    %533 = vmatpush1.bf16.msra.mxu0 %v369
    %534 = vmatprep.subr.bf16.mxu0 0
    %535 = vmatpush1.bf16.msra.mxu0 %v370
    %536 = vmatprep.subr.bf16.mxu0 0
    %537 = vmatpush1.bf16.msra.mxu0 %v371
    %538 = vmatprep.mubr.bf16.mxu0 %v28
    %539 = vmatmul.mubr.bf16.gmra.mrb[0].mxu0 %v27
    %v540 = vpop.f32.mrb[0].mxu0
    %v541 = vadd.f32 %v501, %v540
    %v542 = vpop.f32.mrb[0].mxu0
    %v543 = vpop.f32.mrb[0].mxu0
    %v544 = vpop.f32.mrb[0].mxu0
    %545 = vdwg.mxu0
    %546 = vmatprep.subr.bf16.mxu0 0
    %547 = vmatpush1.bf16.msra.mxu0 %v372
    %548 = vmatprep.subr.bf16.mxu0 0
    %549 = vmatpush1.bf16.msra.mxu0 0
    %550 = vmatprep.subr.bf16.mxu0 0
    %551 = vmatpush1.bf16.msra.mxu0 0
    %552 = vmatprep.subr.bf16.mxu0 0
    %553 = vmatpush1.bf16.msra.mxu0 0
    %554 = vmatprep.subr.bf16.mxu0 0
    %555 = vmatpush1.bf16.msra.mxu0 0
    %556 = vmatprep.subr.bf16.mxu0 0
    %557 = vmatpush1.bf16.msra.mxu0 0
    %558 = vmatprep.subr.bf16.mxu0 0
    %559 = vmatpush1.bf16.msra.mxu0 0
    %560 = vmatprep.subr.bf16.mxu0 0
    %561 = vmatpush1.bf16.msra.mxu0 0
    %562 = vmatprep.subr.bf16.mxu0 0
    %563 = vmatpush1.bf16.msra.mxu0 0
    %564 = vmatprep.subr.bf16.mxu0 0
    %565 = vmatpush1.bf16.msra.mxu0 0
    %566 = vmatprep.subr.bf16.mxu0 0
    %567 = vmatpush1.bf16.msra.mxu0 0
    %568 = vmatprep.subr.bf16.mxu0 0
    %569 = vmatpush1.bf16.msra.mxu0 0
    %570 = vmatprep.subr.bf16.mxu0 0
    %571 = vmatpush1.bf16.msra.mxu0 0
    %572 = vmatprep.subr.bf16.mxu0 0
    %573 = vmatpush1.bf16.msra.mxu0 0
    %574 = vmatprep.subr.bf16.mxu0 0
    %575 = vmatpush1.bf16.msra.mxu0 0
    %576 = vmatprep.subr.bf16.mxu0 0
    %577 = vmatpush1.bf16.msra.mxu0 0
    %578 = vmatprep.mubr.bf16.mxu0 0
    %579 = vmatmul.mubr.bf16.gmra.mrb[0].mxu0 %v424
    %v580 = vpop.f32.mrb[0].mxu0
    %v581 = vadd.f32 %v541, %v580
    %v582 = vpop.f32.mrb[0].mxu0
    %v583 = vpop.f32.mrb[0].mxu0
    %v584 = vpop.f32.mrb[0].mxu0
    %585 = vdwg.mxu0
    %v586 = vmax.f32 %v581, 0.0
    %v587 = vpack.c.bf16 %v586, %v586
    %v588 = vld [vmem:[%s2] sm:$0xf]
    %v589 = vld [vmem:[%s2 + $0x4] sm:$0xf]
    %v590 = vld [vmem:[%s2 + $0x8] sm:$0xf]
    %v591 = vld [vmem:[%s2 + $0xc] sm:$0xf]
    %v592 = vld [vmem:[%s2 + $0x10] sm:$0xf]
    %v593 = vld [vmem:[%s2 + $0x14] sm:$0xf]
    %v594 = vld [vmem:[%s2 + $0x18] sm:$0xf]
    %v595 = vld [vmem:[%s2 + $0x1c] sm:$0xf]
    %v596 = vld [vmem:[%s2 + $0x20] sm:$0xf]
    %v597 = vld [vmem:[%s2 + $0x24] sm:$0xf]
    %v598 = vld [vmem:[%s2 + $0x28] sm:$0xf]
    %v599 = vld [vmem:[%s2 + $0x2c] sm:$0xf]
    %v600 = vld [vmem:[%s2 + $0x30] sm:$0xf]
    %v601 = vld [vmem:[%s2 + $0x34] sm:$0xf]
    %v602 = vld [vmem:[%s2 + $0x38] sm:$0xf]
    %v603 = vld [vmem:[%s2 + $0x3c] sm:$0xf]
    %v620 = vunpack.c.l.b16 %v588
    %v621 = vunpack.c.l.b16 %v589
    %v622 = vunpack.c.l.b16 %v590
    %v623 = vunpack.c.l.b16 %v591
    %v624 = vunpack.c.l.b16 %v592
    %v625 = vunpack.c.l.b16 %v593
    %v626 = vunpack.c.l.b16 %v594
    %v627 = vunpack.c.l.b16 %v595
    %v628 = vunpack.c.l.b16 %v596
    %v629 = vunpack.c.l.b16 %v597
    %v630 = vunpack.c.l.b16 %v598
    %v631 = vunpack.c.l.b16 %v599
    %v632 = vunpack.c.l.b16 %v600
    %v633 = vunpack.c.l.b16 %v601
    %v634 = vunpack.c.l.b16 %v602
    %v635 = vunpack.c.l.b16 %v603
    %v636 = vpack.c.b16 %v621, %v620
    %v637 = vpack.c.b16 %v623, %v622
    %v638 = vpack.c.b16 %v625, %v624
    %v639 = vpack.c.b16 %v627, %v626
    %v640 = vpack.c.b16 %v629, %v628
    %v641 = vpack.c.b16 %v631, %v630
    %v642 = vpack.c.b16 %v633, %v632
    %v643 = vpack.c.b16 %v635, %v634
    %652 = vmatprep.subr.bf16.mxu0 0
    %653 = vmatpush1.bf16.msra.mxu0 %v636
    %654 = vmatprep.subr.bf16.mxu0 0
    %655 = vmatpush1.bf16.msra.mxu0 %v637
    %656 = vmatprep.subr.bf16.mxu0 0
    %657 = vmatpush1.bf16.msra.mxu0 %v638
    %658 = vmatprep.subr.bf16.mxu0 0
    %659 = vmatpush1.bf16.msra.mxu0 %v639
    %660 = vmatprep.subr.bf16.mxu0 0
    %661 = vmatpush1.bf16.msra.mxu0 %v640
    %662 = vmatprep.subr.bf16.mxu0 0
    %663 = vmatpush1.bf16.msra.mxu0 %v641
    %664 = vmatprep.subr.bf16.mxu0 0
    %665 = vmatpush1.bf16.msra.mxu0 %v642
    %666 = vmatprep.subr.bf16.mxu0 0
    %667 = vmatpush1.bf16.msra.mxu0 %v643
    %668 = vmatprep.subr.bf16.mxu0 0
    %669 = vmatpush1.bf16.msra.mxu0 0
    %670 = vmatprep.subr.bf16.mxu0 0
    %671 = vmatpush1.bf16.msra.mxu0 0
    %672 = vmatprep.subr.bf16.mxu0 0
    %673 = vmatpush1.bf16.msra.mxu0 0
    %674 = vmatprep.subr.bf16.mxu0 0
    %675 = vmatpush1.bf16.msra.mxu0 0
    %676 = vmatprep.subr.bf16.mxu0 0
    %677 = vmatpush1.bf16.msra.mxu0 0
    %678 = vmatprep.subr.bf16.mxu0 0
    %679 = vmatpush1.bf16.msra.mxu0 0
    %680 = vmatprep.subr.bf16.mxu0 0
    %681 = vmatpush1.bf16.msra.mxu0 0
    %682 = vmatprep.subr.bf16.mxu0 0
    %683 = vmatpush1.bf16.msra.mxu0 0
    %684 = vmatprep.mubr.bf16.mxu0 0
    %685 = vmatmul.mubr.bf16.gmra.mrb[0].mxu0 %v587
    %v686 = vpop.f32.mrb[0].mxu0
    %v687 = vadd.f32 0.0, %v686
    %v688 = vpop.f32.mrb[0].mxu0
    %v689 = vpop.f32.mrb[0].mxu0
    %v690 = vpop.f32.mrb[0].mxu0
    %691 = vdwg.mxu0
    %v692 = vmax.f32 %v687, 0.0
    %v693 = vpack.c.bf16 %v692, %v692
    %v694 = vld [vmem:[%s2 + $0x40] sm:$0xf]
    %v695 = vld [vmem:[%s2 + $0x44] sm:$0xf]
    %v696 = vld [vmem:[%s2 + $0x48] sm:$0xf]
    %v697 = vld [vmem:[%s2 + $0x4c] sm:$0xf]
    %v698 = vld [vmem:[%s2 + $0x50] sm:$0xf]
    %v699 = vld [vmem:[%s2 + $0x54] sm:$0xf]
    %v700 = vld [vmem:[%s2 + $0x58] sm:$0xf]
    %v701 = vld [vmem:[%s2 + $0x5c] sm:$0xf]
    %v702 = vld [vmem:[%s2 + $0x60] sm:$0xf]
    %v703 = vld [vmem:[%s2 + $0x64] sm:$0xf]
    %v704 = vld [vmem:[%s2 + $0x68] sm:$0xf]
    %v705 = vld [vmem:[%s2 + $0x6c] sm:$0xf]
    %v706 = vld [vmem:[%s2 + $0x70] sm:$0xf]
    %v707 = vld [vmem:[%s2 + $0x74] sm:$0xf]
    %v708 = vld [vmem:[%s2 + $0x78] sm:$0xf]
    %v709 = vld [vmem:[%s2 + $0x7c] sm:$0xf]
    %v710 = vld [vmem:[%s2 + $0x80] sm:$0x1]
    %v711 = vunpack.c.l.bf16 %v710
    %v712 = vlaneseq
    %v713 = vshrl.u32 %v712, 7
    %v714 = vsub.s32 0, %v713
    %v715 = vrot.slane %v711, %v714
    %v732 = vunpack.c.l.b16 %v694
    %v733 = vunpack.c.l.b16 %v695
    %v734 = vunpack.c.l.b16 %v696
    %v735 = vunpack.c.l.b16 %v697
    %v736 = vunpack.c.l.b16 %v698
    %v737 = vunpack.c.l.b16 %v699
    %v738 = vunpack.c.l.b16 %v700
    %v739 = vunpack.c.l.b16 %v701
    %v740 = vunpack.c.l.b16 %v702
    %v741 = vunpack.c.l.b16 %v703
    %v742 = vunpack.c.l.b16 %v704
    %v743 = vunpack.c.l.b16 %v705
    %v744 = vunpack.c.l.b16 %v706
    %v745 = vunpack.c.l.b16 %v707
    %v746 = vunpack.c.l.b16 %v708
    %v747 = vunpack.c.l.b16 %v709
    %v748 = vpack.c.b16 %v733, %v732
    %v749 = vpack.c.b16 %v735, %v734
    %v750 = vpack.c.b16 %v737, %v736
    %v751 = vpack.c.b16 %v739, %v738
    %v752 = vpack.c.b16 %v741, %v740
    %v753 = vpack.c.b16 %v743, %v742
    %v754 = vpack.c.b16 %v745, %v744
    %v755 = vpack.c.b16 %v747, %v746
    %764 = vmatprep.subr.bf16.mxu0 0
    %765 = vmatpush1.bf16.msra.mxu0 %v748
    %766 = vmatprep.subr.bf16.mxu0 0
    %767 = vmatpush1.bf16.msra.mxu0 %v749
    %768 = vmatprep.subr.bf16.mxu0 0
    %769 = vmatpush1.bf16.msra.mxu0 %v750
    %770 = vmatprep.subr.bf16.mxu0 0
    %771 = vmatpush1.bf16.msra.mxu0 %v751
    %772 = vmatprep.subr.bf16.mxu0 0
    %773 = vmatpush1.bf16.msra.mxu0 %v752
    %774 = vmatprep.subr.bf16.mxu0 0
    %775 = vmatpush1.bf16.msra.mxu0 %v753
    %776 = vmatprep.subr.bf16.mxu0 0
    %777 = vmatpush1.bf16.msra.mxu0 %v754
    %778 = vmatprep.subr.bf16.mxu0 0
    %779 = vmatpush1.bf16.msra.mxu0 %v755
    %780 = vmatprep.subr.bf16.mxu0 0
    %781 = vmatpush1.bf16.msra.mxu0 0
    %782 = vmatprep.subr.bf16.mxu0 0
    %783 = vmatpush1.bf16.msra.mxu0 0
    %784 = vmatprep.subr.bf16.mxu0 0
    %785 = vmatpush1.bf16.msra.mxu0 0
    %786 = vmatprep.subr.bf16.mxu0 0
    %787 = vmatpush1.bf16.msra.mxu0 0
    %788 = vmatprep.subr.bf16.mxu0 0
    %789 = vmatpush1.bf16.msra.mxu0 0
    %790 = vmatprep.subr.bf16.mxu0 0
    %791 = vmatpush1.bf16.msra.mxu0 0
    %792 = vmatprep.subr.bf16.mxu0 0
    %793 = vmatpush1.bf16.msra.mxu0 0
    %794 = vmatprep.subr.bf16.mxu0 0
    %795 = vmatpush1.bf16.msra.mxu0 0
    %796 = vmatprep.mubr.bf16.mxu0 0
    %797 = vmatmul.mubr.bf16.gmra.mrb[0].mxu0 %v693
    %v798 = vpop.f32.mrb[0].mxu0
    %v799 = vadd.f32 %v715, %v798
    %v800 = vpop.f32.mrb[0].mxu0
    %v801 = vpop.f32.mrb[0].mxu0
    %v802 = vpop.f32.mrb[0].mxu0
    %803 = vdwg.mxu0
    %v804 = vmax.f32 %v799, 0.0
    %v805 = vpack.c.bf16 %v804, %v804
    %v806 = vld [vmem:[%s2 + $0x84] sm:$0xf]
    %v807 = vld [vmem:[%s2 + $0x88] sm:$0xf]
    %v808 = vld [vmem:[%s2 + $0x8c] sm:$0xf]
    %v809 = vld [vmem:[%s2 + $0x90] sm:$0xf]
    %v810 = vld [vmem:[%s2 + $0x94] sm:$0xf]
    %v811 = vld [vmem:[%s2 + $0x98] sm:$0xf]
    %v812 = vld [vmem:[%s2 + $0x9c] sm:$0xf]
    %v813 = vld [vmem:[%s2 + $0xa0] sm:$0xf]
    %v814 = vld [vmem:[%s2 + $0xa4] sm:$0xf]
    %v815 = vld [vmem:[%s2 + $0xa8] sm:$0xf]
    %v816 = vld [vmem:[%s2 + $0xac] sm:$0xf]
    %v817 = vld [vmem:[%s2 + $0xb0] sm:$0xf]
    %v818 = vld [vmem:[%s2 + $0xb4] sm:$0xf]
    %v819 = vld [vmem:[%s2 + $0xb8] sm:$0xf]
    %v820 = vld [vmem:[%s2 + $0xbc] sm:$0xf]
    %v821 = vld [vmem:[%s2 + $0xc0] sm:$0xf]
    %v838 = vunpack.c.l.b16 %v806
    %v839 = vunpack.c.l.b16 %v807
    %v840 = vunpack.c.l.b16 %v808
    %v841 = vunpack.c.l.b16 %v809
    %v842 = vunpack.c.l.b16 %v810
    %v843 = vunpack.c.l.b16 %v811
    %v844 = vunpack.c.l.b16 %v812
    %v845 = vunpack.c.l.b16 %v813
    %v846 = vunpack.c.l.b16 %v814
    %v847 = vunpack.c.l.b16 %v815
    %v848 = vunpack.c.l.b16 %v816
    %v849 = vunpack.c.l.b16 %v817
    %v850 = vunpack.c.l.b16 %v818
    %v851 = vunpack.c.l.b16 %v819
    %v852 = vunpack.c.l.b16 %v820
    %v853 = vunpack.c.l.b16 %v821
    %v854 = vpack.c.b16 %v839, %v838
    %v855 = vpack.c.b16 %v841, %v840
    %v856 = vpack.c.b16 %v843, %v842
    %v857 = vpack.c.b16 %v845, %v844
    %v858 = vpack.c.b16 %v847, %v846
    %v859 = vpack.c.b16 %v849, %v848
    %v860 = vpack.c.b16 %v851, %v850
    %v861 = vpack.c.b16 %v853, %v852
    %870 = vmatprep.subr.bf16.mxu0 0
    %871 = vmatpush1.bf16.msra.mxu0 %v854
    %872 = vmatprep.subr.bf16.mxu0 0
    %873 = vmatpush1.bf16.msra.mxu0 %v855
    %874 = vmatprep.subr.bf16.mxu0 0
    %875 = vmatpush1.bf16.msra.mxu0 %v856
    %876 = vmatprep.subr.bf16.mxu0 0
    %877 = vmatpush1.bf16.msra.mxu0 %v857
    %878 = vmatprep.subr.bf16.mxu0 0
    %879 = vmatpush1.bf16.msra.mxu0 %v858
    %880 = vmatprep.subr.bf16.mxu0 0
    %881 = vmatpush1.bf16.msra.mxu0 %v859
    %882 = vmatprep.subr.bf16.mxu0 0
    %883 = vmatpush1.bf16.msra.mxu0 %v860
    %884 = vmatprep.subr.bf16.mxu0 0
    %885 = vmatpush1.bf16.msra.mxu0 %v861
    %886 = vmatprep.subr.bf16.mxu0 0
    %887 = vmatpush1.bf16.msra.mxu0 0
    %888 = vmatprep.subr.bf16.mxu0 0
    %889 = vmatpush1.bf16.msra.mxu0 0
    %890 = vmatprep.subr.bf16.mxu0 0
    %891 = vmatpush1.bf16.msra.mxu0 0
    %892 = vmatprep.subr.bf16.mxu0 0
    %893 = vmatpush1.bf16.msra.mxu0 0
    %894 = vmatprep.subr.bf16.mxu0 0
    %895 = vmatpush1.bf16.msra.mxu0 0
    %896 = vmatprep.subr.bf16.mxu0 0
    %897 = vmatpush1.bf16.msra.mxu0 0
    %898 = vmatprep.subr.bf16.mxu0 0
    %899 = vmatpush1.bf16.msra.mxu0 0
    %900 = vmatprep.subr.bf16.mxu0 0
    %901 = vmatpush1.bf16.msra.mxu0 0
    %902 = vmatprep.mubr.bf16.mxu0 0
    %903 = vmatmul.mubr.bf16.gmra.mrb[0].mxu0 %v805
    %v904 = vpop.f32.mrb[0].mxu0
    %v905 = vadd.f32 0.0, %v904
    %v906 = vpop.f32.mrb[0].mxu0
    %v907 = vpop.f32.mrb[0].mxu0
    %v908 = vpop.f32.mrb[0].mxu0
    %909 = vdwg.mxu0
    %v910 = vmax.f32 %v905, 0.0
    %v911 = vpack.c.bf16 %v910, %v910
    %v912 = vld [vmem:[%s2 + $0xc4] sm:$0xf]
    %v913 = vld [vmem:[%s2 + $0xc8] sm:$0xf]
    %v914 = vld [vmem:[%s2 + $0xcc] sm:$0xf]
    %v915 = vld [vmem:[%s2 + $0xd0] sm:$0xf]
    %v916 = vld [vmem:[%s2 + $0xd4] sm:$0xf]
    %v917 = vld [vmem:[%s2 + $0xd8] sm:$0xf]
    %v918 = vld [vmem:[%s2 + $0xdc] sm:$0xf]
    %v919 = vld [vmem:[%s2 + $0xe0] sm:$0xf]
    %v920 = vld [vmem:[%s2 + $0xe4] sm:$0xf]
    %v921 = vld [vmem:[%s2 + $0xe8] sm:$0xf]
    %v922 = vld [vmem:[%s2 + $0xec] sm:$0xf]
    %v923 = vld [vmem:[%s2 + $0xf0] sm:$0xf]
    %v924 = vld [vmem:[%s2 + $0xf4] sm:$0xf]
    %v925 = vld [vmem:[%s2 + $0xf8] sm:$0xf]
    %v926 = vld [vmem:[%s2 + $0xfc] sm:$0xf]
    %v927 = vld [vmem:[%s2 + $0x100] sm:$0xf]
    %v944 = vunpack.c.l.b16 %v912
    %v945 = vunpack.c.l.b16 %v913
    %v946 = vunpack.c.l.b16 %v914
    %v947 = vunpack.c.l.b16 %v915
    %v948 = vunpack.c.l.b16 %v916
    %v949 = vunpack.c.l.b16 %v917
    %v950 = vunpack.c.l.b16 %v918
    %v951 = vunpack.c.l.b16 %v919
    %v952 = vunpack.c.l.b16 %v920
    %v953 = vunpack.c.l.b16 %v921
    %v954 = vunpack.c.l.b16 %v922
    %v955 = vunpack.c.l.b16 %v923
    %v956 = vunpack.c.l.b16 %v924
    %v957 = vunpack.c.l.b16 %v925
    %v958 = vunpack.c.l.b16 %v926
    %v959 = vunpack.c.l.b16 %v927
    %v960 = vpack.c.b16 %v945, %v944
    %v961 = vpack.c.b16 %v947, %v946
    %v962 = vpack.c.b16 %v949, %v948
    %v963 = vpack.c.b16 %v951, %v950
    %v964 = vpack.c.b16 %v953, %v952
    %v965 = vpack.c.b16 %v955, %v954
    %v966 = vpack.c.b16 %v957, %v956
    %v967 = vpack.c.b16 %v959, %v958
    %976 = vmatprep.subr.bf16.mxu0 0
    %977 = vmatpush1.bf16.msra.mxu0 %v960
    %978 = vmatprep.subr.bf16.mxu0 0
    %979 = vmatpush1.bf16.msra.mxu0 %v961
    %980 = vmatprep.subr.bf16.mxu0 0
    %981 = vmatpush1.bf16.msra.mxu0 %v962
    %982 = vmatprep.subr.bf16.mxu0 0
    %983 = vmatpush1.bf16.msra.mxu0 %v963
    %984 = vmatprep.subr.bf16.mxu0 0
    %985 = vmatpush1.bf16.msra.mxu0 %v964
    %986 = vmatprep.subr.bf16.mxu0 0
    %987 = vmatpush1.bf16.msra.mxu0 %v965
    %988 = vmatprep.subr.bf16.mxu0 0
    %989 = vmatpush1.bf16.msra.mxu0 %v966
    %990 = vmatprep.subr.bf16.mxu0 0
    %991 = vmatpush1.bf16.msra.mxu0 %v967
    %992 = vmatprep.subr.bf16.mxu0 0
    %993 = vmatpush1.bf16.msra.mxu0 0
    %994 = vmatprep.subr.bf16.mxu0 0
    %995 = vmatpush1.bf16.msra.mxu0 0
    %996 = vmatprep.subr.bf16.mxu0 0
    %997 = vmatpush1.bf16.msra.mxu0 0
    %998 = vmatprep.subr.bf16.mxu0 0
    %999 = vmatpush1.bf16.msra.mxu0 0
    %1000 = vmatprep.subr.bf16.mxu0 0
    %1001 = vmatpush1.bf16.msra.mxu0 0
    %1002 = vmatprep.subr.bf16.mxu0 0
    %1003 = vmatpush1.bf16.msra.mxu0 0
    %1004 = vmatprep.subr.bf16.mxu0 0
    %1005 = vmatpush1.bf16.msra.mxu0 0
    %1006 = vmatprep.subr.bf16.mxu0 0
    %1007 = vmatpush1.bf16.msra.mxu0 0
    %1008 = vmatprep.mubr.bf16.mxu0 0
    %1009 = vmatmul.mubr.bf16.gmra.mrb[0].mxu0 %v911
    %v1010 = vpop.f32.mrb[0].mxu0
    %v1011 = vadd.f32 0.0, %v1010
    %v1012 = vpop.f32.mrb[0].mxu0
    %v1013 = vpop.f32.mrb[0].mxu0
    %v1014 = vpop.f32.mrb[0].mxu0
    %1015 = vdwg.mxu0
    %v1016 = vlaneseq
    %v1017 = vand.u32 %v1016, 127
    %vm1018 = vcmp.lt.s32.totalorder %v1017, 10
    %v1019 = vsel %vm1018, %v1011, -1e+30
    %1020 = vmax.xlane.f32.xlu0 %v1019
    %v1021 = vpop.xlane.xlu0 %1020
    %v1022 = vsub.f32 %v1019, %v1021
    %v1023 = vmul.f32 %v1022, 1.442695
    %v1024 = vpow.pop %v1023
    %1025 = vadd.xlane.f32.xlu0 %v1024
    %v1026 = vpop.xlane.xlu0 %1025
    %v1027 = vlog2.pop %v1026
    %v1028 = vmul.f32 %v1027, 0.6931472
    %v1029 = vadd.f32 %v1021, %v1028
    %v1030 = vsub.f32 %v1011, %v1029
    %v1031 = vsel %vm1018, %v1030, 0.0
    %1032 = vst [vmem:[#allocation2] sm:$0xff] %v1031
    // Predicated region
    $region14: #{linear_relu_16_forward.1} parent=1 // pred_check
      _
    $region15: #{linear_relu_16_forward.1} parent=1 // pred_check_branch
      %1034 = sbr.rel (0) target = $region17
    $region16: #{linear_relu_16_forward.1} parent=1 // pred_region
      %s1036 = ssub.s32 128, 128
      %1037 = vsyncadd [#allocation3], %s1036
      %s1039 = sshll.u32 [#allocation2], 4
      %s1040 = int_to_ptr.vmem [resolvable:$true] %s1039
      %1042 = dma.vmem_to_hbm [thread:$0]  %s1040, 128, %s3, [#allocation3]
    $region17: #{linear_relu_16_forward.1} parent=1 // pred_fallthru
      _
    // Predicated region
    $region18: #{linear_relu_16_forward.1} parent=1 // pred_check
      _
    $region19: #{linear_relu_16_forward.1} parent=1 // pred_check_branch
      %1044 = sbr.rel (0) target = $region21
    $region20: #{linear_relu_16_forward.1} parent=1 // pred_region
      %1045 = dma.done [#allocation3], 128
    $region21: #{linear_relu_16_forward.1} parent=1 // pred_fallthru
      _
    %1046 = vsyncpa [#allocation3], 1

</llo_original>
